<compile_context>
chip_gen: v7x
topology: tpu7x:2x2x1
jax: 0.10.0
libtpu: 0.0.40
codegen_flags: <defaults>
</compile_context>

<pallas_src>
import functools

import numpy as np
import jax
import jax.numpy as jnp
from jax.experimental import pallas as pl
from jax.experimental.pallas import tpu as pltpu


def _dice_ce_kernel(pred_ref, tgt_ref, gaus_ref, w_ref,
                    inter_ref, card_ref, ce_ref, *,
                    tile_s, s_valid, need_mask, uniform_w):
    j = pl.program_id(1)

    x = pred_ref[0].astype(jnp.float32)          # (C, TS) logits
    t = tgt_ref[0]                               # (1, TS) int32 labels
    g = gaus_ref[0]                              # (1, TS) f32 gaussian map

    # softmax over the class (sublane) axis
    m = jnp.max(x, axis=0, keepdims=True)        # (1, TS)
    ex = jnp.exp(x - m)                          # (C, TS)
    se = jnp.sum(ex, axis=0, keepdims=True)      # (1, TS)
    probs = ex / se                              # (C, TS)

    # one-hot of the target along the class axis
    cls = jax.lax.broadcasted_iota(jnp.int32, x.shape, 0)
    onehot = (cls == t).astype(jnp.float32)      # (C, TS)

    if need_mask:
        lane = jax.lax.broadcasted_iota(jnp.int32, (1, tile_s), 1)
        valid = (j * tile_s + lane) < s_valid    # (1, TS) bool
        probs_m = jnp.where(valid, probs, 0.0)   # select → NaN-safe
        onehot_m = jnp.where(valid, onehot, 0.0)
    else:
        valid = None
        probs_m = probs
        onehot_m = onehot

    # dice partials: per-class sums over the lane (spatial) axis
    inter_part = jnp.sum(probs_m * onehot_m, axis=1, keepdims=True)   # (C, 1)
    card_part = jnp.sum(probs_m + onehot_m, axis=1, keepdims=True)    # (C, 1)

    # per-pixel weighted cross-entropy: -w[t] * log_softmax(x)[t]
    x_t = jnp.sum(x * onehot, axis=0, keepdims=True)                  # (1, TS)
    logp_t = (x_t - m) - jnp.log(se)                                  # (1, TS)
    if uniform_w:
        ce = -logp_t
    else:
        w = w_ref[...].astype(jnp.float32)                            # (C, 1)
        w_t = jnp.sum(w * onehot, axis=0, keepdims=True)              # (1, TS)
        ce = -(w_t * logp_t)
    ce = ce * g
    if need_mask:
        ce = jnp.where(valid, ce, 0.0)
    ce_part = jnp.sum(ce, axis=1, keepdims=True)                      # (1, 1)

    @pl.when(j == 0)
    def _():
        inter_ref[...] = jnp.zeros_like(inter_ref)
        card_ref[...] = jnp.zeros_like(card_ref)
        ce_ref[...] = jnp.zeros_like(ce_ref)

    inter_ref[0] += inter_part
    card_ref[0] += card_part
    ce_ref[0] += ce_part


def _gaussian_kernel_2d(kernel_size):
    """scipy.signal.gaussian(K, std=K//4) outer product, done host-side (constant)."""
    std = max(kernel_size // 4, 1)
    idx = np.arange(kernel_size, dtype=np.float64) - (kernel_size - 1) / 2.0
    g1 = np.exp(-0.5 * (idx / std) ** 2)
    return np.outer(g1, g1).astype(np.float32)                        # (K, K)


def dice_ce_gaus_weighted(pred, target, class_weights_ce, *, kernel_size=None,
                          dice_weight=1.0, ce_weight=1.0, eps=1e-7,
                          max_tile_bytes=512 * 1024):
    """JAX/Pallas equivalent of DiceCEGausWeighted.forward.

    pred:   (N, C, H, W) raw logits (any float dtype; upcast in-kernel).
    target: (N, H, W) int class indices.
    """
    n, c, h, w = pred.shape
    s = h * w
    if kernel_size is None:
        kernel_size = h
    assert kernel_size == h == w, "gaussian kernel must match the spatial size"

    gaus2d = _gaussian_kernel_2d(kernel_size)
    gaus = jnp.asarray(gaus2d.reshape(1, 1, s))                       # (1, 1, S)

    w_np = np.asarray(class_weights_ce, np.float32).reshape(c, 1)
    uniform_w = bool(np.all(w_np == 1.0))
    w_col = jnp.asarray(w_np)                                         # (C, 1)

    # free reshapes — native (N, C, H*W) layout, spatial on the lane axis
    pred3 = pred.reshape(n, c, s)
    tgt3 = target.reshape(n, 1, s).astype(jnp.int32)

    # lane-dense spatial tiling, ~max_tile_bytes per pred block
    desired = max(128, (max_tile_bytes // (4 * c)) // 128 * 128)
    tile_s = s if s <= desired else desired
    num_tiles = (s + tile_s - 1) // tile_s
    need_mask = (s % tile_s) != 0

    kernel = functools.partial(_dice_ce_kernel, tile_s=tile_s, s_valid=s,
                               need_mask=need_mask, uniform_w=uniform_w)

    inter, card, ce_sum = pl.pallas_call(
        kernel,
        out_shape=(
            jax.ShapeDtypeStruct((n, c, 1), jnp.float32),   # per-batch intersection
            jax.ShapeDtypeStruct((n, c, 1), jnp.float32),   # per-batch cardinality
            jax.ShapeDtypeStruct((n, 1, 1), jnp.float32),   # per-batch weighted-CE sum
        ),
        grid_spec=pltpu.PrefetchScalarGridSpec(
            num_scalar_prefetch=0,
            grid=(n, num_tiles),
            in_specs=[
                pl.BlockSpec((1, c, tile_s), lambda b, j: (b, 0, j)),
                pl.BlockSpec((1, 1, tile_s), lambda b, j: (b, 0, j)),
                pl.BlockSpec((1, 1, tile_s), lambda b, j: (0, 0, j)),
                pl.BlockSpec((c, 1), lambda b, j: (0, 0)),
            ],
            out_specs=[
                pl.BlockSpec((1, c, 1), lambda b, j: (b, 0, 0)),
                pl.BlockSpec((1, c, 1), lambda b, j: (b, 0, 0)),
                pl.BlockSpec((1, 1, 1), lambda b, j: (b, 0, 0)),
            ],
        ),
        compiler_params=pltpu.CompilerParams(
            dimension_semantics=("parallel", "arbitrary")),
    )(pred3, tgt3, gaus, w_col)

    # tiny epilogue on (C,)-sized partials
    inter_c = jnp.sum(inter[:, :, 0], axis=0)                         # (C,)
    card_c = jnp.sum(card[:, :, 0], axis=0)                           # (C,)
    dice = jnp.mean(2.0 * inter_c / (card_c + eps))
    dice_l = 1.0 - dice
    ce_mean = jnp.sum(ce_sum) / (n * s)
    return dice_weight * dice_l + ce_weight * ce_mean


def _reference_loss(pred, target, class_weights, gaus2d,
                    dice_weight=1.0, ce_weight=1.0, eps=1e-7):
    """Pure numpy reference mirroring the torch module."""
    pred = np.asarray(pred, np.float64)
    target = np.asarray(target)
    b, c, h, w = pred.shape
    m = pred.max(axis=1, keepdims=True)
    e = np.exp(pred - m)
    se = e.sum(axis=1, keepdims=True)
    probs = e / se
    onehot = (target[:, None, :, :] ==
              np.arange(c)[None, :, None, None]).astype(np.float64)
    inter = (probs * onehot).sum(axis=(0, 2, 3))
    card = (probs + onehot).sum(axis=(0, 2, 3))
    dice_l = 1.0 - (2.0 * inter / (card + eps)).mean()
    logp = (pred - m) - np.log(se)
    logp_t = np.take_along_axis(logp, target[:, None, :, :], axis=1)[:, 0]
    w_t = np.asarray(class_weights, np.float64)[target]
    ce = -(w_t * logp_t) * np.asarray(gaus2d, np.float64)[None, :, :]
    return dice_weight * dice_l + ce_weight * ce.mean()


if __name__ == "__main__":
    key = jax.random.PRNGKey(0)
    k1, k2 = jax.random.split(key)

    N, C, H, W = 2, 4, 16, 16
    pred = jax.random.normal(k1, (N, C, H, W), dtype=jnp.float32)      # raw logits
    target = jax.random.randint(k2, (N, H, W), 0, C, dtype=jnp.int32)
    class_weights = [1.0, 2.0, 0.5, 1.5]

    loss = dice_ce_gaus_weighted(pred, target, class_weights,
                                 kernel_size=H, dice_weight=1.0, ce_weight=1.0)
    loss = jax.block_until_ready(loss)

    ref = _reference_loss(np.asarray(pred), np.asarray(target),
                          class_weights, _gaussian_kernel_2d(H),
                          dice_weight=1.0, ce_weight=1.0)
    assert np.allclose(np.asarray(loss), ref, rtol=1e-4, atol=1e-5), \
        (float(loss), float(ref))

    print("KERNEL_OK")
</pallas_src>

<mosaic_0001>
module attributes {stable_mosaic.version = 11 : i64} {
  func.func @_dice_ce_kernel(%arg0: i32, %arg1: i32, %arg2: memref<1x4x256xf32, #tpu.memory_space<vmem>>, %arg3: memref<1x1x256xi32, #tpu.memory_space<vmem>>, %arg4: memref<1x1x256xf32, #tpu.memory_space<vmem>>, %arg5: memref<4x1xf32, #tpu.memory_space<vmem>>, %arg6: memref<1x4x1xf32, #tpu.memory_space<vmem>>, %arg7: memref<1x4x1xf32, #tpu.memory_space<vmem>>, %arg8: memref<1x1x1xf32, #tpu.memory_space<vmem>>) attributes {dimension_semantics = [#tpu.dimension_semantics<parallel>, #tpu.dimension_semantics<arbitrary>], iteration_bounds = array<i64: 2, 1>, scalar_prefetch = 0 : i64, scratch_operands = 0 : i64, tpu.core_type = #tpu.core_type<tc>, window_params = [{transform_indices = @transform_0, window_bounds = array<i64: 1, 4, 256>}, {transform_indices = @transform_1, window_bounds = array<i64: 1, 1, 256>}, {transform_indices = @transform_2, window_bounds = array<i64: 1, 1, 256>}, {pipeline_mode = #tpu.pipeline_mode<synchronous>, transform_indices = @transform_3, window_bounds = array<i64: 4, 1>}, {transform_indices = @transform_4, window_bounds = array<i64: 1, 4, 1>}, {transform_indices = @transform_5, window_bounds = array<i64: 1, 4, 1>}, {transform_indices = @transform_6, window_bounds = array<i64: 1, 1, 1>}]} {
    %c0 = arith.constant 0 : index
    %c0_0 = arith.constant 0 : index
    %c0_1 = arith.constant 0 : index
    %0 = vector.load %arg2[%c0, %c0_0, %c0_1] : memref<1x4x256xf32, #tpu.memory_space<vmem>>, vector<1x4x256xf32>
    %1 = vector.shape_cast %0 : vector<1x4x256xf32> to vector<4x256xf32>
    %c0_2 = arith.constant 0 : index
    %c0_3 = arith.constant 0 : index
    %c0_4 = arith.constant 0 : index
    %2 = vector.load %arg3[%c0_2, %c0_3, %c0_4] : memref<1x1x256xi32, #tpu.memory_space<vmem>>, vector<1x1x256xi32>
    %3 = vector.shape_cast %2 : vector<1x1x256xi32> to vector<1x256xi32>
    %c0_5 = arith.constant 0 : index
    %c0_6 = arith.constant 0 : index
    %c0_7 = arith.constant 0 : index
    %4 = vector.load %arg4[%c0_5, %c0_6, %c0_7] : memref<1x1x256xf32, #tpu.memory_space<vmem>>, vector<1x1x256xf32>
    %5 = vector.shape_cast %4 : vector<1x1x256xf32> to vector<1x256xf32>
    %cst = arith.constant dense<0xFF800000> : vector<256xf32>
    %6 = vector.multi_reduction <maximumf>, %1, %cst [0] : vector<4x256xf32> to vector<256xf32>
    %7 = vector.shape_cast %6 : vector<256xf32> to vector<1x256xf32>
    %8 = vector.broadcast %7 : vector<1x256xf32> to vector<4x256xf32>
    %9 = arith.subf %1, %8 : vector<4x256xf32>
    %10 = math.exp %9 : vector<4x256xf32>
    %cst_8 = arith.constant dense<0.000000e+00> : vector<256xf32>
    %11 = vector.multi_reduction <add>, %10, %cst_8 [0] : vector<4x256xf32> to vector<256xf32>
    %12 = vector.shape_cast %11 : vector<256xf32> to vector<1x256xf32>
    %13 = vector.broadcast %12 : vector<1x256xf32> to vector<4x256xf32>
    %14 = arith.divf %10, %13 : vector<4x256xf32>
    %15 = tpu.iota {dimensions = array<i32: 0>} : vector<4x256xi32>
    %16 = vector.broadcast %3 : vector<1x256xi32> to vector<4x256xi32>
    %17 = arith.cmpi eq, %15, %16 : vector<4x256xi32>
    %18 = arith.extui %17 : vector<4x256xi1> to vector<4x256xi32>
    %19 = arith.sitofp %18 : vector<4x256xi32> to vector<4x256xf32>
    %20 = arith.mulf %14, %19 : vector<4x256xf32>
    %cst_9 = arith.constant dense<0.000000e+00> : vector<4xf32>
    %21 = vector.multi_reduction <add>, %20, %cst_9 [1] : vector<4x256xf32> to vector<4xf32>
    %22 = vector.shape_cast %21 : vector<4xf32> to vector<4x1xf32>
    %23 = arith.addf %14, %19 : vector<4x256xf32>
    %cst_10 = arith.constant dense<0.000000e+00> : vector<4xf32>
    %24 = vector.multi_reduction <add>, %23, %cst_10 [1] : vector<4x256xf32> to vector<4xf32>
    %25 = vector.shape_cast %24 : vector<4xf32> to vector<4x1xf32>
    %26 = arith.mulf %1, %19 : vector<4x256xf32>
    %cst_11 = arith.constant dense<0.000000e+00> : vector<256xf32>
    %27 = vector.multi_reduction <add>, %26, %cst_11 [0] : vector<4x256xf32> to vector<256xf32>
    %28 = vector.shape_cast %27 : vector<256xf32> to vector<1x256xf32>
    %29 = arith.subf %28, %7 : vector<1x256xf32>
    %30 = math.log %12 : vector<1x256xf32>
    %31 = arith.subf %29, %30 : vector<1x256xf32>
    %c0_12 = arith.constant 0 : index
    %c0_13 = arith.constant 0 : index
    %32 = vector.load %arg5[%c0_12, %c0_13] : memref<4x1xf32, #tpu.memory_space<vmem>>, vector<4x1xf32>
    %33 = vector.broadcast %32 : vector<4x1xf32> to vector<4x256xf32>
    %34 = arith.mulf %33, %19 : vector<4x256xf32>
    %cst_14 = arith.constant dense<0.000000e+00> : vector<256xf32>
    %35 = vector.multi_reduction <add>, %34, %cst_14 [0] : vector<4x256xf32> to vector<256xf32>
    %36 = vector.shape_cast %35 : vector<256xf32> to vector<1x256xf32>
    %37 = arith.mulf %36, %31 : vector<1x256xf32>
    %cst_15 = arith.constant 0.000000e+00 : f32
    %38 = vector.broadcast %cst_15 : f32 to vector<1x256xf32>
    %39 = arith.subf %38, %37 : vector<1x256xf32>
    %40 = arith.mulf %39, %5 : vector<1x256xf32>
    %cst_16 = arith.constant dense<0.000000e+00> : vector<1xf32>
    %41 = vector.multi_reduction <add>, %40, %cst_16 [1] : vector<1x256xf32> to vector<1xf32>
    %42 = vector.shape_cast %41 : vector<1xf32> to vector<1x1xf32>
    %c0_i32 = arith.constant 0 : i32
    %43 = arith.cmpi eq, %arg1, %c0_i32 : i32
    %44 = arith.extui %43 : i1 to i32
    %c0_i32_17 = arith.constant 0 : i32
    %45 = arith.cmpi ne, %44, %c0_i32_17 : i32
    scf.if %45 {
      %cst_36 = arith.constant 0.000000e+00 : f32
      %64 = vector.broadcast %cst_36 : f32 to vector<1x4x1xf32>
      %c0_37 = arith.constant 0 : index
      %c0_38 = arith.constant 0 : index
      %c0_39 = arith.constant 0 : index
      %65 = vector.load %arg6[%c0_37, %c0_38, %c0_39] : memref<1x4x1xf32, #tpu.memory_space<vmem>>, vector<1x4x1xf32>
      tpu.vector_store %arg6[%c0_37, %c0_38, %c0_39], %64 {strides = array<i32>} : memref<1x4x1xf32, #tpu.memory_space<vmem>>, vector<1x4x1xf32>,
      %cst_40 = arith.constant 0.000000e+00 : f32
      %66 = vector.broadcast %cst_40 : f32 to vector<1x4x1xf32>
      %c0_41 = arith.constant 0 : index
      %c0_42 = arith.constant 0 : index
      %c0_43 = arith.constant 0 : index
      %67 = vector.load %arg7[%c0_41, %c0_42, %c0_43] : memref<1x4x1xf32, #tpu.memory_space<vmem>>, vector<1x4x1xf32>
      tpu.vector_store %arg7[%c0_41, %c0_42, %c0_43], %66 {strides = array<i32>} : memref<1x4x1xf32, #tpu.memory_space<vmem>>, vector<1x4x1xf32>,
      %cst_44 = arith.constant 0.000000e+00 : f32
      %68 = vector.broadcast %cst_44 : f32 to vector<1x1x1xf32>
      %c0_45 = arith.constant 0 : index
      %c0_46 = arith.constant 0 : index
      %c0_47 = arith.constant 0 : index
      %69 = vector.load %arg8[%c0_45, %c0_46, %c0_47] : memref<1x1x1xf32, #tpu.memory_space<vmem>>, vector<1x1x1xf32>
      tpu.vector_store %arg8[%c0_45, %c0_46, %c0_47], %68 {strides = array<i32>} : memref<1x1x1xf32, #tpu.memory_space<vmem>>, vector<1x1x1xf32>,
    } else {
    }
    %c0_18 = arith.constant 0 : index
    %c0_19 = arith.constant 0 : index
    %c0_20 = arith.constant 0 : index
    %46 = vector.load %arg6[%c0_18, %c0_19, %c0_20] : memref<1x4x1xf32, #tpu.memory_space<vmem>>, vector<1x4x1xf32>
    %47 = vector.shape_cast %46 : vector<1x4x1xf32> to vector<4x1xf32>
    %48 = arith.addf %47, %22 : vector<4x1xf32>
    %c0_21 = arith.constant 0 : index
    %c0_22 = arith.constant 0 : index
    %c0_23 = arith.constant 0 : index
    %49 = vector.load %arg6[%c0_21, %c0_22, %c0_23] : memref<1x4x1xf32, #tpu.memory_space<vmem>>, vector<1x4x1xf32>
    %50 = vector.shape_cast %49 : vector<1x4x1xf32> to vector<4x1xf32>
    %51 = vector.shape_cast %48 : vector<4x1xf32> to vector<1x4x1xf32>
    tpu.vector_store %arg6[%c0_21, %c0_22, %c0_23], %51 {strides = array<i32>} : memref<1x4x1xf32, #tpu.memory_space<vmem>>, vector<1x4x1xf32>,
    %c0_24 = arith.constant 0 : index
    %c0_25 = arith.constant 0 : index
    %c0_26 = arith.constant 0 : index
    %52 = vector.load %arg7[%c0_24, %c0_25, %c0_26] : memref<1x4x1xf32, #tpu.memory_space<vmem>>, vector<1x4x1xf32>
    %53 = vector.shape_cast %52 : vector<1x4x1xf32> to vector<4x1xf32>
    %54 = arith.addf %53, %25 : vector<4x1xf32>
    %c0_27 = arith.constant 0 : index
    %c0_28 = arith.constant 0 : index
    %c0_29 = arith.constant 0 : index
    %55 = vector.load %arg7[%c0_27, %c0_28, %c0_29] : memref<1x4x1xf32, #tpu.memory_space<vmem>>, vector<1x4x1xf32>
    %56 = vector.shape_cast %55 : vector<1x4x1xf32> to vector<4x1xf32>
    %57 = vector.shape_cast %54 : vector<4x1xf32> to vector<1x4x1xf32>
    tpu.vector_store %arg7[%c0_27, %c0_28, %c0_29], %57 {strides = array<i32>} : memref<1x4x1xf32, #tpu.memory_space<vmem>>, vector<1x4x1xf32>,
    %c0_30 = arith.constant 0 : index
    %c0_31 = arith.constant 0 : index
    %c0_32 = arith.constant 0 : index
    %58 = vector.load %arg8[%c0_30, %c0_31, %c0_32] : memref<1x1x1xf32, #tpu.memory_space<vmem>>, vector<1x1x1xf32>
    %59 = vector.shape_cast %58 : vector<1x1x1xf32> to vector<1x1xf32>
    %60 = arith.addf %59, %42 : vector<1x1xf32>
    %c0_33 = arith.constant 0 : index
    %c0_34 = arith.constant 0 : index
    %c0_35 = arith.constant 0 : index
    %61 = vector.load %arg8[%c0_33, %c0_34, %c0_35] : memref<1x1x1xf32, #tpu.memory_space<vmem>>, vector<1x1x1xf32>
    %62 = vector.shape_cast %61 : vector<1x1x1xf32> to vector<1x1xf32>
    %63 = vector.shape_cast %60 : vector<1x1xf32> to vector<1x1x1xf32>
    tpu.vector_store %arg8[%c0_33, %c0_34, %c0_35], %63 {strides = array<i32>} : memref<1x1x1xf32, #tpu.memory_space<vmem>>, vector<1x1x1xf32>,
    return
  }
  func.func @transform_0(%arg0: i32, %arg1: i32) -> (i32, i32, i32) {
    %c0_i32 = arith.constant 0 : i32
    %c0_i32_0 = arith.constant 0 : i32
    return %arg0, %c0_i32, %arg1 : i32, i32, i32
  }
  func.func @transform_1(%arg0: i32, %arg1: i32) -> (i32, i32, i32) {
    %c0_i32 = arith.constant 0 : i32
    %c0_i32_0 = arith.constant 0 : i32
    return %arg0, %c0_i32, %arg1 : i32, i32, i32
  }
  func.func @transform_2(%arg0: i32, %arg1: i32) -> (i32, i32, i32) {
    %c0_i32 = arith.constant 0 : i32
    %c0_i32_0 = arith.constant 0 : i32
    %c0_i32_1 = arith.constant 0 : i32
    return %c0_i32, %c0_i32_0, %arg1 : i32, i32, i32
  }
  func.func @transform_3(%arg0: i32, %arg1: i32) -> (i32, i32) {
    %c0_i32 = arith.constant 0 : i32
    %c0_i32_0 = arith.constant 0 : i32
    %c0_i32_1 = arith.constant 0 : i32
    return %c0_i32, %c0_i32_0 : i32, i32
  }
  func.func @transform_4(%arg0: i32, %arg1: i32) -> (i32, i32, i32) {
    %c0_i32 = arith.constant 0 : i32
    %c0_i32_0 = arith.constant 0 : i32
    %c0_i32_1 = arith.constant 0 : i32
    return %arg0, %c0_i32, %c0_i32_0 : i32, i32, i32
  }
  func.func @transform_5(%arg0: i32, %arg1: i32) -> (i32, i32, i32) {
    %c0_i32 = arith.constant 0 : i32
    %c0_i32_0 = arith.constant 0 : i32
    %c0_i32_1 = arith.constant 0 : i32
    return %arg0, %c0_i32, %c0_i32_0 : i32, i32, i32
  }
  func.func @transform_6(%arg0: i32, %arg1: i32) -> (i32, i32, i32) {
    %c0_i32 = arith.constant 0 : i32
    %c0_i32_0 = arith.constant 0 : i32
    %c0_i32_1 = arith.constant 0 : i32
    return %arg0, %c0_i32, %c0_i32_0 : i32, i32, i32
  }
}

</mosaic_0001>

<llo_original>
// kernel: tpu_custom_call.1
$region0: #{tpu_custom_call.1}
  #allocation0 [shape = 'u32[]', space=smem, size = 0x4, offset = 0x4, fixed_abs, tag = 'smem constant byte address 0x4 - core index']
  #allocation1 [shape = 'u32[144,128]{1,0:T(1,128)}', space=vmem, size = 0x12000, scoped, tag = 'internal scratch']
  %s0 = inlined_call_operand.hbm [shape: f32[2,4,256], index: 0, kind: input, shape index: {}]
  %s1 = inlined_call_operand.vmem [shape: s32[2,1,256], index: 1, kind: input, shape index: {}]
  %s2 = inlined_call_operand.vmem [shape: f32[1,1,256], index: 2, kind: input, shape index: {}]
  %s3 = inlined_call_operand.vmem [shape: f32[4,1], index: 3, kind: input, shape index: {}]
  %s4 = inlined_call_operand.vmem [shape: f32[2,4,1], index: 4, kind: output, shape index: {0}]
  %s5 = inlined_call_operand.vmem [shape: f32[2,4,1], index: 5, kind: output, shape index: {1}]
  %s6 = inlined_call_operand.vmem [shape: f32[2,1,1], index: 6, kind: output, shape index: {2}]
  %7 = xla_tuple %s4, %s5, %s6
  %s8 = sld [smem:[#allocation0]]
  $region73: #{tpu_custom_call.1} parent=0
    _
  %s10 = ssub.s32 1, %s8
  %s11 = scalar_select 0, %s10, %s8
  $region1: #{tpu_custom_call.1} parent=0
    #allocation2 [shape = 'u8[8192]{0}', space=vmem, size = 0x2000, scoped, tag = 'input window, operand 0']
    #allocation3 [shape = 's32[2]{0}', space=sflag, size = 0x8, scoped, tag = 'scoped memory for tpu_custom_call.1']
    %12 = vsyncpa [#allocation3], 0
    %s13 = scalar_lea.sflag [#allocation3], 1
    %14 = vsyncpa %s13, 0
    loop: start=0, step=1, limit=4
    $region2: #{tpu_custom_call.1} parent=1 // loop_pre_header
      _
    $region3: #{tpu_custom_call.1} parent=1 // loop_header
      %s16 = sphi 0, %s20
      %p17 = scmp.ge.s32.totalorder %s16, 4
      %s23 = sphi 0, %s35
      %s24 = sphi 0, %s31
      %s25 = sphi 0, %s23
      %s26 = sphi 0, %s24
      %s27 = sphi 0, %s25
      %s28 = sphi 0, %s26
      %s40 = sphi 0, %s42
      %s43 = sphi 0, %s40
      %s44 = sphi 0, %s43
      %s60 = sphi 0, %s44
      %s68 = sphi 0, %s70
      %s71 = sphi 0, %s68
      %s72 = sphi 0, %s71
      %s88 = sphi 0, %s72
      %s94 = sphi 0, %s96
      %s97 = sphi 0, %s94
      %s98 = sphi 0, %s97
      %s114 = sphi 0, %s98
      %s118 = sphi 0, %s118
      %s120 = sphi 0, %s118
      %s121 = sphi 0, %s120
      %s135 = sphi 0, %s121
      %s141 = sphi 0, %s143
      %s144 = sphi 0, %s141
      %s145 = sphi 0, %s144
      %s161 = sphi 0, %s145
      %s167 = sphi 0, %s169
      %s170 = sphi 0, %s167
      %s171 = sphi 0, %s170
      %s187 = sphi 0, %s171
      %s193 = sphi 0, %s195
      %s196 = sphi 0, %s193
      %s197 = sphi 0, %s196
      %s213 = sphi 0, %s197
    $region4: #{tpu_custom_call.1} parent=1 // loop_header_branch
      %19 = sbr.rel (%p17) target = $region8
    $region5: #{tpu_custom_call.1} parent=1 // loop_body
      %s21 = ssub.s32 %s16, 1
      %s22 = ssub.s32 %s16, 2
      %s29 = sadd.s32 1, %s24
      %p30 = scmp.ge.s32.totalorder %s29, 1
      %s31 = scalar_select %p30, 0, %s29
      %s32 = sadd.s32 1, %s23
      %s33 = scalar_select %p30, %s32, %s23
      %p34 = scmp.ge.s32.totalorder %s33, 2
      %s35 = scalar_select %p34, 0, %s33
      %s36 = ssub.s32 %s23, %s35
      %s37 = ssub.s32 %s24, %s31
      %s38 = sor.u32 %s36, %s37
      %p39 = scmp.eq.s32.totalorder %s38, 0
      %s41 = sadd.s32 %s40, 1
      %s42 = scalar_select %p39, %s40, %s41
      %p45 = pneg %p39
      %p46 = scmp.eq.s32.totalorder %s16, 1
      %p47 = por %p45, %p46
      %p48 = scmp.ne.s32.totalorder %s40, %s43
      %p49 = scmp.eq.s32.totalorder %s16, 0
      %p50 = por %p48, %p49
      %p51 = scmp.ne.s32.totalorder %s40, %s43
      %p52 = scmp.eq.s32.totalorder %s21, 1
      %p53 = por %p51, %p52
      %p54 = scmp.ne.s32.totalorder %s43, %s44
      %p55 = scmp.eq.s32.totalorder %s21, 0
      %p56 = por %p54, %p55
      %p57 = scmp.ne.s32.totalorder %s43, %s44
      %p58 = scmp.eq.s32.totalorder %s22, 1
      %p59 = por %p57, %p58
      %p61 = scmp.ne.s32.totalorder %s44, %s60
      %p62 = scmp.eq.s32.totalorder %s22, 0
      %p63 = por %p61, %p62
      %s64 = ssub.s32 %s23, %s35
      %s65 = ssub.s32 %s24, %s31
      %s66 = sor.u32 %s64, %s65
      %p67 = scmp.eq.s32.totalorder %s66, 0
      %s69 = sadd.s32 %s68, 1
      %s70 = scalar_select %p67, %s68, %s69
      %p73 = pneg %p67
      %p74 = scmp.eq.s32.totalorder %s16, 1
      %p75 = por %p73, %p74
      %p76 = scmp.ne.s32.totalorder %s68, %s71
      %p77 = scmp.eq.s32.totalorder %s16, 0
      %p78 = por %p76, %p77
      %p79 = scmp.ne.s32.totalorder %s68, %s71
      %p80 = scmp.eq.s32.totalorder %s21, 1
      %p81 = por %p79, %p80
      %p82 = scmp.ne.s32.totalorder %s71, %s72
      %p83 = scmp.eq.s32.totalorder %s21, 0
      %p84 = por %p82, %p83
      %p85 = scmp.ne.s32.totalorder %s71, %s72
      %p86 = scmp.eq.s32.totalorder %s22, 1
      %p87 = por %p85, %p86
      %p89 = scmp.ne.s32.totalorder %s72, %s88
      %p90 = scmp.eq.s32.totalorder %s22, 0
      %p91 = por %p89, %p90
      %s92 = ssub.s32 %s24, %s31
      %p93 = scmp.eq.s32.totalorder %s92, 0
      %s95 = sadd.s32 %s94, 1
      %s96 = scalar_select %p93, %s94, %s95
      %p99 = pneg %p93
      %p100 = scmp.eq.s32.totalorder %s16, 1
      %p101 = por %p99, %p100
      %p102 = scmp.ne.s32.totalorder %s94, %s97
      %p103 = scmp.eq.s32.totalorder %s16, 0
      %p104 = por %p102, %p103
      %p105 = scmp.ne.s32.totalorder %s94, %s97
      %p106 = scmp.eq.s32.totalorder %s21, 1
      %p107 = por %p105, %p106
      %p108 = scmp.ne.s32.totalorder %s97, %s98
      %p109 = scmp.eq.s32.totalorder %s21, 0
      %p110 = por %p108, %p109
      %p111 = scmp.ne.s32.totalorder %s97, %s98
      %p112 = scmp.eq.s32.totalorder %s22, 1
      %p113 = por %p111, %p112
      %p115 = scmp.ne.s32.totalorder %s98, %s114
      %p116 = scmp.eq.s32.totalorder %s22, 0
      %p117 = por %p115, %p116
      %s119 = sadd.s32 %s118, 1
      %p122 = scmp.eq.s32.totalorder %s16, 1
      %p123 = scmp.ne.s32.totalorder %s118, %s120
      %p124 = scmp.eq.s32.totalorder %s16, 0
      %p125 = por %p123, %p124
      %p126 = scmp.ne.s32.totalorder %s118, %s120
      %p127 = scmp.eq.s32.totalorder %s21, 1
      %p128 = por %p126, %p127
      %p129 = scmp.ne.s32.totalorder %s120, %s121
      %p130 = scmp.eq.s32.totalorder %s21, 0
      %p131 = por %p129, %p130
      %p132 = scmp.ne.s32.totalorder %s120, %s121
      %p133 = scmp.eq.s32.totalorder %s22, 1
      %p134 = por %p132, %p133
      %p136 = scmp.ne.s32.totalorder %s121, %s135
      %p137 = scmp.eq.s32.totalorder %s22, 0
      %p138 = por %p136, %p137
      %s139 = ssub.s32 %s23, %s35
      %p140 = scmp.eq.s32.totalorder %s139, 0
      %s142 = sadd.s32 %s141, 1
      %s143 = scalar_select %p140, %s141, %s142
      %p146 = pneg %p140
      %p147 = scmp.eq.s32.totalorder %s16, 1
      %p148 = por %p146, %p147
      %p149 = scmp.ne.s32.totalorder %s141, %s144
      %p150 = scmp.eq.s32.totalorder %s16, 0
      %p151 = por %p149, %p150
      %p152 = scmp.ne.s32.totalorder %s141, %s144
      %p153 = scmp.eq.s32.totalorder %s21, 1
      %p154 = por %p152, %p153
      %p155 = scmp.ne.s32.totalorder %s144, %s145
      %p156 = scmp.eq.s32.totalorder %s21, 0
      %p157 = por %p155, %p156
      %p158 = scmp.ne.s32.totalorder %s144, %s145
      %p159 = scmp.eq.s32.totalorder %s22, 1
      %p160 = por %p158, %p159
      %p162 = scmp.ne.s32.totalorder %s145, %s161
      %p163 = scmp.eq.s32.totalorder %s22, 0
      %p164 = por %p162, %p163
      %s165 = ssub.s32 %s23, %s35
      %p166 = scmp.eq.s32.totalorder %s165, 0
      %s168 = sadd.s32 %s167, 1
      %s169 = scalar_select %p166, %s167, %s168
      %p172 = pneg %p166
      %p173 = scmp.eq.s32.totalorder %s16, 1
      %p174 = por %p172, %p173
      %p175 = scmp.ne.s32.totalorder %s167, %s170
      %p176 = scmp.eq.s32.totalorder %s16, 0
      %p177 = por %p175, %p176
      %p178 = scmp.ne.s32.totalorder %s167, %s170
      %p179 = scmp.eq.s32.totalorder %s21, 1
      %p180 = por %p178, %p179
      %p181 = scmp.ne.s32.totalorder %s170, %s171
      %p182 = scmp.eq.s32.totalorder %s21, 0
      %p183 = por %p181, %p182
      %p184 = scmp.ne.s32.totalorder %s170, %s171
      %p185 = scmp.eq.s32.totalorder %s22, 1
      %p186 = por %p184, %p185
      %p188 = scmp.ne.s32.totalorder %s171, %s187
      %p189 = scmp.eq.s32.totalorder %s22, 0
      %p190 = por %p188, %p189
      %s191 = ssub.s32 %s23, %s35
      %p192 = scmp.eq.s32.totalorder %s191, 0
      %s194 = sadd.s32 %s193, 1
      %s195 = scalar_select %p192, %s193, %s194
      %p198 = pneg %p192
      %p199 = scmp.eq.s32.totalorder %s16, 1
      %p200 = por %p198, %p199
      %p201 = scmp.ne.s32.totalorder %s193, %s196
      %p202 = scmp.eq.s32.totalorder %s16, 0
      %p203 = por %p201, %p202
      %p204 = scmp.ne.s32.totalorder %s193, %s196
      %p205 = scmp.eq.s32.totalorder %s21, 1
      %p206 = por %p204, %p205
      %p207 = scmp.ne.s32.totalorder %s196, %s197
      %p208 = scmp.eq.s32.totalorder %s21, 0
      %p209 = por %p207, %p208
      %p210 = scmp.ne.s32.totalorder %s196, %s197
      %p211 = scmp.eq.s32.totalorder %s22, 1
      %p212 = por %p210, %p211
      %p214 = scmp.ne.s32.totalorder %s197, %s213
      %p215 = scmp.eq.s32.totalorder %s22, 0
      %p216 = por %p214, %p215
      %p217 = scmp.le.s32.totalorder 1, %s16
      %p218 = scmp.lt.s32.totalorder %s16, 3
      %p219 = pnand %p217, %p218
      %p220 = pneg %p219
      // Predicated region
      $region9: #{tpu_custom_call.1} parent=5 // pred_check
        _
      $region10: #{tpu_custom_call.1} parent=5 // pred_check_branch
        %222 = sbr.rel (%p219) target = $region12
      $region11: #{tpu_custom_call.1} parent=5 // pred_region
        %s223 = ssub.s32 %s16, 1
        // Predicated region
        $region13: #{tpu_custom_call.1} parent=11 // pred_check
          %p224 = pneg %p110
        $region14: #{tpu_custom_call.1} parent=11 // pred_check_branch
          %226 = sbr.rel (%p224) target = $region16
        $region15: #{tpu_custom_call.1} parent=11 // pred_region
          %s227 = smul.u32 2, %s26
          %p228 = scmp.lt.s32.totalorder %s227, 1
          %s229 = scalar_select %p228, %s227, 1
          %s230 = scalar_lea.vmem %s2, %s229
          %s231 = smul.u32 2, %s26
        $region16: #{tpu_custom_call.1} parent=11 // pred_fallthru
          _
        // Predicated region
        $region17: #{tpu_custom_call.1} parent=11 // pred_check
          %p232 = pneg %p131
        $region18: #{tpu_custom_call.1} parent=11 // pred_check_branch
          %234 = sbr.rel (%p232) target = $region20
        $region19: #{tpu_custom_call.1} parent=11 // pred_region
          _
        $region20: #{tpu_custom_call.1} parent=11 // pred_fallthru
          _
      $region12: #{tpu_custom_call.1} parent=5 // pred_fallthru
        _
      %p235 = scmp.lt.s32.totalorder %s16, 2
      // Predicated region
      $region21: #{tpu_custom_call.1} parent=5 // pred_check
        %p236 = pneg %p235
      $region22: #{tpu_custom_call.1} parent=5 // pred_check_branch
        %238 = sbr.rel (%p236) target = $region24
      $region23: #{tpu_custom_call.1} parent=5 // pred_region
        // Predicated region
        $region25: #{tpu_custom_call.1} parent=23 // pred_check
          %p239 = pneg %p50
        $region26: #{tpu_custom_call.1} parent=23 // pred_check_branch
          %241 = sbr.rel (%p239) target = $region28
        $region27: #{tpu_custom_call.1} parent=23 // pred_region
          %s242 = sand.u32 %s40, 1
          %s243 = scalar_lea.sflag [#allocation3], %s242
          %s244 = sand.u32 %s40, 1
          %s245 = smul.addr %s244, 8
          %s246 = scalar_lea.vmem [#allocation2], %s245
          %s247 = smul.u32 2, %s24
          %s249 = ssub.s32 128, 128
          %250 = vsyncadd %s243, %s249
          %s251 = smul.addr %s23, 2
          %s252 = sadd.s32 %s247, %s251
          %s253 = smul.addr %s252, 64
          %s254 = scalar_lea.hbm %s0, %s253
          %s256 = sshll.u32 %s246, 4
          %s257 = int_to_ptr.vmem [resolvable:$true] %s256
          %259 = dma.hbm_to_vmem [thread:$0]  %s254, 128, %s257, %s243
        $region28: #{tpu_custom_call.1} parent=23 // pred_fallthru
          _
        // Predicated region
        $region29: #{tpu_custom_call.1} parent=23 // pred_check
          %p260 = pneg %p78
        $region30: #{tpu_custom_call.1} parent=23 // pred_check_branch
          %262 = sbr.rel (%p260) target = $region32
        $region31: #{tpu_custom_call.1} parent=23 // pred_region
          %s263 = smul.u32 2, %s24
          %p264 = scmp.lt.s32.totalorder %s23, 1
          %s265 = scalar_select %p264, %s23, 1
          %p266 = scmp.lt.s32.totalorder %s263, 1
          %s267 = scalar_select %p266, %s263, 1
          %s268 = smul.addr %s265, 2
          %s269 = sadd.s32 %s267, %s268
          %s270 = scalar_lea.vmem %s1, %s269
          %s271 = smul.u32 2, %s24
        $region32: #{tpu_custom_call.1} parent=23 // pred_fallthru
          _
      $region24: #{tpu_custom_call.1} parent=5 // pred_fallthru
        _
      %p272 = scmp.le.s32.totalorder 1, %s16
      %p273 = scmp.lt.s32.totalorder %s16, 3
      %p274 = pnand %p272, %p273
      %p275 = pneg %p274
      // Predicated region
      $region33: #{tpu_custom_call.1} parent=5 // pred_check
        _
      $region34: #{tpu_custom_call.1} parent=5 // pred_check_branch
        %277 = sbr.rel (%p274) target = $region36
      $region35: #{tpu_custom_call.1} parent=5 // pred_region
        %s278 = ssub.s32 %s16, 1
        %s279 = sand.u32 %s43, 1
        %s280 = scalar_lea.sflag [#allocation3], %s279
        %s281 = sand.u32 %s43, 1
        %s282 = smul.addr %s281, 8
        %s283 = scalar_lea.vmem [#allocation2], %s282
        // Predicated region
        $region37: #{tpu_custom_call.1} parent=35 // pred_check
          %p284 = pneg %p56
        $region38: #{tpu_custom_call.1} parent=35 // pred_check_branch
          %286 = sbr.rel (%p284) target = $region40
        $region39: #{tpu_custom_call.1} parent=35 // pred_region
          %287 = dma.done %s280, 128
        $region40: #{tpu_custom_call.1} parent=35 // pred_fallthru
          _
        %s288 = sand.u32 %s43, 1
        %s289 = scalar_lea.sflag [#allocation3], %s288
        %s290 = sand.u32 %s43, 1
        %s291 = smul.addr %s290, 8
        %s292 = scalar_lea.vmem [#allocation2], %s291
        %p293 = pneg %p56
        %p294 = pneg %p53
        %s295 = smul.u32 2, %s26
        %p296 = scmp.lt.s32.totalorder %s25, 1
        %s297 = scalar_select %p296, %s25, 1
        %p298 = scmp.lt.s32.totalorder %s295, 1
        %s299 = scalar_select %p298, %s295, 1
        %s300 = smul.addr %s297, 2
        %s301 = sadd.s32 %s299, %s300
        %s302 = scalar_lea.vmem %s1, %s301
        %p303 = pneg %p84
        %p304 = pneg %p81
        %s305 = smul.u32 2, %s26
        %p306 = scmp.lt.s32.totalorder %s305, 1
        %s307 = scalar_select %p306, %s305, 1
        %s308 = scalar_lea.vmem %s2, %s307
        %p309 = pneg %p110
        %p310 = pneg %p107
        %p311 = pneg %p131
        %p312 = pneg %p128
        %p313 = pneg %p157
        %p314 = pneg %p154
        %p315 = scmp.lt.s32.totalorder %s25, 1
        %s316 = scalar_select %p315, %s25, 1
        %s317 = smul.addr %s316, 4
        %s318 = scalar_lea.vmem %s4, %s317
        %p319 = pneg %p183
        %p320 = pneg %p180
        %p321 = scmp.lt.s32.totalorder %s25, 1
        %s322 = scalar_select %p321, %s25, 1
        %s323 = smul.addr %s322, 4
        %s324 = scalar_lea.vmem %s5, %s323
        %p325 = pneg %p209
        %p326 = pneg %p206
        %p327 = scmp.lt.s32.totalorder %s25, 1
        %s328 = scalar_select %p327, %s25, 1
        %s329 = scalar_lea.vmem %s6, %s328
        %s330 = smul.u32 2, %s26
        %s331 = smul.u32 2, %s26
        %p332 = scmp.lt.s32.totalorder %s25, 1
        %s333 = scalar_select %p332, %s25, 1
        %p334 = scmp.lt.s32.totalorder %s331, 1
        %s335 = scalar_select %p334, %s331, 1
        %s336 = smul.addr %s333, 2
        %s337 = sadd.s32 %s335, %s336
        %s338 = scalar_lea.vmem %s1, %s337
        %s339 = smul.u32 2, %s26
        %s340 = smul.u32 2, %s26
        %p341 = scmp.lt.s32.totalorder %s340, 1
        %s342 = scalar_select %p341, %s340, 1
        %s343 = scalar_lea.vmem %s2, %s342
        %s344 = smul.u32 2, %s26
        %p345 = scmp.lt.s32.totalorder %s25, 1
        %s346 = scalar_select %p345, %s25, 1
        %s347 = smul.addr %s346, 4
        %s348 = scalar_lea.vmem %s4, %s347
        %p349 = scmp.lt.s32.totalorder %s25, 1
        %s350 = scalar_select %p349, %s25, 1
        %s351 = smul.addr %s350, 4
        %s352 = scalar_lea.vmem %s5, %s351
        %p353 = scmp.lt.s32.totalorder %s25, 1
        %s354 = scalar_select %p353, %s25, 1
        %s355 = scalar_lea.vmem %s6, %s354
        %v356 = vld [vmem:[%s283] sm:$0xff]
        %v357 = vld [vmem:[%s338] sm:$0x3]
        %v358 = vld [vmem:[%s343] sm:$0x3]
        %v360 = vcombine.high %v356, %v356
        %vm362 = vcmask 1043456
        %v363 = vsel %vm362, %v356, -inf
        %v364 = vrot.slane %v363, 4
        %v365 = vmax.f32 %v363, %v364
        %v366 = vrot.slane %v365, 2
        %v367 = vmax.f32 %v365, %v366
        %v368 = vrot.slane %v367, 1
        %v369 = vmax.f32 %v367, %v368
        %v370 = vsel %vm362, %v360, -inf
        %v371 = vrot.slane %v370, 4
        %v372 = vmax.f32 %v370, %v371
        %v373 = vrot.slane %v372, 2
        %v374 = vmax.f32 %v372, %v373
        %v375 = vrot.slane %v374, 1
        %v376 = vmax.f32 %v374, %v375
        %v379 = vcombine.low %v369, %v376
        %v381 = vsub.f32 %v356, %v379
        %v382 = vmul.f32 %v381, 1.442695
        %v383 = vpow.pop %v382
        %v385 = vcombine.high %v383, %v383
        %v387 = vsel %vm362, %v383, 0.0
        %v388 = vrot.slane %v387, 4
        %v389 = vadd.f32 %v387, %v388
        %v390 = vrot.slane %v389, 2
        %v391 = vadd.f32 %v389, %v390
        %v392 = vrot.slane %v391, 1
        %v393 = vadd.f32 %v391, %v392
        %v394 = vsel %vm362, %v385, 0.0
        %v395 = vrot.slane %v394, 4
        %v396 = vadd.f32 %v394, %v395
        %v397 = vrot.slane %v396, 2
        %v398 = vadd.f32 %v396, %v397
        %v399 = vrot.slane %v398, 1
        %v400 = vadd.f32 %v398, %v399
        %v403 = vcombine.low %v393, %v400
        %v405 = vrcp.pop %v403
        %v406 = vmul.f32 %v383, %v405
        %v407 = vlaneseq
        %v408 = vshrl.u32 %v407, 7
        %v409 = vlaneseq
        %v410 = vshrl.u32 %v409, 7
        %v411 = vsub.s32 0, %v410
        %v412 = vrot.slane %v357, %v411
        %v413 = vlaneseq
        %v414 = vshrl.u32 %v413, 7
        %v415 = vsub.s32 1, %v414
        %v416 = vrot.slane %v357, %v415
        %vm417 = vcmp.eq.s32.totalorder %v408, %v412
        %vm418 = vcmp.eq.s32.totalorder %v408, %v416
        %v419 = vsel %vm417, 1, 0
        %v420 = vsel %vm418, 1, 0
        %v421 = vcvt.s32.f32 %v419
        %v422 = vcvt.s32.f32 %v420
        %v425 = vcombine.low %v421, %v422
        %v427 = vmul.f32 %v406, %v425
        %v429 = vcombine.high %v427, %v427
        %v431 = vsel %vm362, %v427, 0.0
        %v432 = vsel %vm362, %v429, 0.0
        %v433 = vadd.f32 %v431, %v432
        %434 = vadd.xlane.f32.xlu0 %v433
        %v435 = vpop.xlane.xlu0 %434
        %v436 = vadd.f32 %v406, %v425
        %v438 = vcombine.high %v436, %v436
        %v440 = vsel %vm362, %v436, 0.0
        %v441 = vsel %vm362, %v438, 0.0
        %v442 = vadd.f32 %v440, %v441
        %443 = vadd.xlane.f32.xlu0 %v442
        %v444 = vpop.xlane.xlu0 %443
        %v445 = vmul.f32 %v356, %v425
        %v447 = vcombine.high %v445, %v445
        %v449 = vsel %vm362, %v445, 0.0
        %v450 = vrot.slane %v449, 4
        %v451 = vadd.f32 %v449, %v450
        %v452 = vrot.slane %v451, 2
        %v453 = vadd.f32 %v451, %v452
        %v454 = vrot.slane %v453, 1
        %v455 = vadd.f32 %v453, %v454
        %v456 = vsel %vm362, %v447, 0.0
        %v457 = vrot.slane %v456, 4
        %v458 = vadd.f32 %v456, %v457
        %v459 = vrot.slane %v458, 2
        %v460 = vadd.f32 %v458, %v459
        %v461 = vrot.slane %v460, 1
        %v462 = vadd.f32 %v460, %v461
        %v463 = vsub.f32 %v455, %v369
        %v464 = vsub.f32 %v462, %v376
        %v465 = vlog2.pop %v393
        %v466 = vmul.f32 %v465, 0.6931472
        %v467 = vlog2.pop %v400
        %v468 = vmul.f32 %v467, 0.6931472
        %v469 = vsub.f32 %v463, %v466
        %v470 = vsub.f32 %v464, %v468
        %v471 = vld [vmem:[%s3] sm:$0xf]
        %473 = vset.pattern.permute.xlu0 0
        %474 = vperm.xlu0 %473, %v471
        %v475 = vpop.permute.xlu0 %474
        %v477 = vmul.f32 %v475, %v421
        %v478 = vmul.f32 %v475, %v422
        %v479 = vsel %vm362, %v477, 0.0
        %v480 = vrot.slane %v479, 4
        %v481 = vadd.f32 %v479, %v480
        %v482 = vrot.slane %v481, 2
        %v483 = vadd.f32 %v481, %v482
        %v484 = vrot.slane %v483, 1
        %v485 = vadd.f32 %v483, %v484
        %v486 = vsel %vm362, %v478, 0.0
        %v487 = vrot.slane %v486, 4
        %v488 = vadd.f32 %v486, %v487
        %v489 = vrot.slane %v488, 2
        %v490 = vadd.f32 %v488, %v489
        %v491 = vrot.slane %v490, 1
        %v492 = vadd.f32 %v490, %v491
        %v493 = vmul.f32 %v485, %v469
        %v494 = vmul.f32 %v492, %v470
        %v495 = vsub.f32 0.0, %v493
        %v496 = vsub.f32 0.0, %v494
        %v498 = vlaneseq
        %v499 = vshrl.u32 %v498, 7
        %v500 = vsub.s32 0, %v499
        %v501 = vrot.slane %v358, %v500
        %v502 = vlaneseq
        %v503 = vshrl.u32 %v502, 7
        %v504 = vsub.s32 1, %v503
        %v505 = vrot.slane %v358, %v504
        %v508 = vmul.f32 %v495, %v501
        %v509 = vmul.f32 %v496, %v505
        %vm510 = vcmask 1040384
        %v511 = vsel %vm510, %v508, 0.0
        %v512 = vsel %vm510, %v509, 0.0
        %v513 = vadd.f32 %v511, %v512
        %514 = vadd.xlane.f32.xlu0 %v513
        %v515 = vpop.xlane.xlu0 %514
        %p516 = scmp.eq.s32.totalorder %s26, 0
        // Predicated region
        $region41: #{tpu_custom_call.1} parent=35 // pred_check
          %p517 = pneg %p516
        $region42: #{tpu_custom_call.1} parent=35 // pred_check_branch
          %519 = sbr.rel (%p517) target = $region44
        $region43: #{tpu_custom_call.1} parent=35 // pred_region
          %vm520 = vcmask 3072
          %521 = vst.msk [vmem:[%s348] sm:$0xf] %vm520, 0.0
          %522 = vst.msk [vmem:[%s352] sm:$0xf] %vm520, 0.0
          %vm523 = vcmask 0
          %524 = vst.msk [vmem:[%s355] sm:$0x1] %vm523, 0.0
        $region44: #{tpu_custom_call.1} parent=35 // pred_fallthru
          _
        %v525 = vld [vmem:[%s348] sm:$0xf]
        %v526 = vadd.f32 %v525, %v435
        %vm527 = vcmask 3072
        %528 = vst.msk [vmem:[%s348] sm:$0xf] %vm527, %v526
        %v529 = vld [vmem:[%s352] sm:$0xf]
        %v530 = vadd.f32 %v529, %v444
        %531 = vst.msk [vmem:[%s352] sm:$0xf] %vm527, %v530
        %v532 = vld [vmem:[%s355] sm:$0x1]
        %v533 = vadd.f32 %v532, %v515
        %vm534 = vcmask 0
        %535 = vst.msk [vmem:[%s355] sm:$0x1] %vm534, %v533
        %p536 = scmp.lt.s32.totalorder %s25, 1
        %s537 = scalar_select %p536, %s25, 1
        %s538 = smul.addr %s537, 4
        %s539 = scalar_lea.vmem %s4, %s538
        %p540 = scmp.lt.s32.totalorder %s25, 1
        %s541 = scalar_select %p540, %s25, 1
        %s542 = smul.addr %s541, 4
        %s543 = scalar_lea.vmem %s5, %s542
        %p544 = scmp.lt.s32.totalorder %s25, 1
        %s545 = scalar_select %p544, %s25, 1
        %s546 = scalar_lea.vmem %s6, %s545
        // Predicated region
        $region45: #{tpu_custom_call.1} parent=35 // pred_check
          %p547 = pneg %p154
        $region46: #{tpu_custom_call.1} parent=35 // pred_check_branch
          %549 = sbr.rel (%p547) target = $region48
        $region47: #{tpu_custom_call.1} parent=35 // pred_region
          _
        $region48: #{tpu_custom_call.1} parent=35 // pred_fallthru
          _
        // Predicated region
        $region49: #{tpu_custom_call.1} parent=35 // pred_check
          %p550 = pneg %p180
        $region50: #{tpu_custom_call.1} parent=35 // pred_check_branch
          %552 = sbr.rel (%p550) target = $region52
        $region51: #{tpu_custom_call.1} parent=35 // pred_region
          _
        $region52: #{tpu_custom_call.1} parent=35 // pred_fallthru
          _
        // Predicated region
        $region53: #{tpu_custom_call.1} parent=35 // pred_check
          %p553 = pneg %p206
        $region54: #{tpu_custom_call.1} parent=35 // pred_check_branch
          %555 = sbr.rel (%p553) target = $region56
        $region55: #{tpu_custom_call.1} parent=35 // pred_region
          _
        $region56: #{tpu_custom_call.1} parent=35 // pred_fallthru
          _
      $region36: #{tpu_custom_call.1} parent=5 // pred_fallthru
        _
      %p556 = scmp.le.s32.totalorder 2, %s16
      // Predicated region
      $region57: #{tpu_custom_call.1} parent=5 // pred_check
        %p557 = pneg %p556
      $region58: #{tpu_custom_call.1} parent=5 // pred_check_branch
        %559 = sbr.rel (%p557) target = $region60
      $region59: #{tpu_custom_call.1} parent=5 // pred_region
        %s560 = ssub.s32 %s16, 2
        // Predicated region
        $region61: #{tpu_custom_call.1} parent=59 // pred_check
          %p561 = pneg %p160
        $region62: #{tpu_custom_call.1} parent=59 // pred_check_branch
          %563 = sbr.rel (%p561) target = $region64
        $region63: #{tpu_custom_call.1} parent=59 // pred_region
          %p564 = scmp.lt.s32.totalorder %s27, 1
          %s565 = scalar_select %p564, %s27, 1
          %s566 = smul.addr %s565, 4
          %s567 = scalar_lea.vmem %s4, %s566
        $region64: #{tpu_custom_call.1} parent=59 // pred_fallthru
          _
        // Predicated region
        $region65: #{tpu_custom_call.1} parent=59 // pred_check
          %p568 = pneg %p186
        $region66: #{tpu_custom_call.1} parent=59 // pred_check_branch
          %570 = sbr.rel (%p568) target = $region68
        $region67: #{tpu_custom_call.1} parent=59 // pred_region
          %p571 = scmp.lt.s32.totalorder %s27, 1
          %s572 = scalar_select %p571, %s27, 1
          %s573 = smul.addr %s572, 4
          %s574 = scalar_lea.vmem %s5, %s573
        $region68: #{tpu_custom_call.1} parent=59 // pred_fallthru
          _
        // Predicated region
        $region69: #{tpu_custom_call.1} parent=59 // pred_check
          %p575 = pneg %p212
        $region70: #{tpu_custom_call.1} parent=59 // pred_check_branch
          %577 = sbr.rel (%p575) target = $region72
        $region71: #{tpu_custom_call.1} parent=59 // pred_region
          %p578 = scmp.lt.s32.totalorder %s27, 1
          %s579 = scalar_select %p578, %s27, 1
          %s580 = scalar_lea.vmem %s6, %s579
        $region72: #{tpu_custom_call.1} parent=59 // pred_fallthru
          _
      $region60: #{tpu_custom_call.1} parent=5 // pred_fallthru
        _
    $region6: #{tpu_custom_call.1} parent=1 // loop_footer
      %s20 = sadd.s32 1, %s16
    $region7: #{tpu_custom_call.1} parent=1 // loop_footer_branch
      %15 = sbr.rel target = $region3
    $region8: #{tpu_custom_call.1} parent=1 // loop_exit
      _
    %581 = vsyncpa [#allocation3], 1
    %s582 = scalar_lea.sflag [#allocation3], 1
    %583 = vsyncpa %s582, 1

</llo_original>
